<compile_context>
chip_gen: v6e
topology: v6e:2x2x1
jax: 0.10.0
libtpu: 0.0.40
codegen_flags: <defaults>
</compile_context>

<pallas_src>
import jax
import jax.numpy as jnp
from jax.experimental import pallas as pl
from jax.experimental.pallas import tpu as pltpu

_HIDDEN = 128
_VMEM_BUDGET = 32 * 1024 * 1024  # scoped-VMEM budget that is safe on v5e/v6e/v7x


def _value_model_kernel(x_ref, w1_ref, b1_ref, w2_ref, b2_ref, o_ref):
    # Layer 1 on the MXU: (TB, obs) @ (obs, 128) -> (TB, 128).
    h = jnp.dot(x_ref[...], w1_ref[...], preferred_element_type=jnp.float32)
    # TODO(synk): nn.Dropout(p=0.6) training-mode masking not modeled (eval identity).
    h = jnp.maximum(h + b1_ref[...], 0.0)                      # bias + ReLU (VPU)

    # Value head: contract the feature (lane) axis of both operands so the
    # result lands batch-on-lanes: (1, 128) . (TB, 128)^T -> (1, TB) lane-dense.
    v = jnp.einsum("od,td->ot", w2_ref[...], h,
                   preferred_element_type=jnp.float32)

    # b2 read from SMEM via the scalar path; single lane-dense store.
    o_ref[...] = v + b2_ref[0, 0]


def _round_up(n, m):
    return ((n + m - 1) // m) * m


def value_model_forward(x, w1, b1, w2_row, b2, *, tb=4096):
    """Forward pass of ValueModel.

    x:      (B, obs) f32
    w1:     (obs, 128) f32      (transposed nn.Linear weight)
    b1:     (1, 128) f32
    w2_row: (1, 128) f32        (value-head weight, lane-dense row)
    b2:     (1, 1) f32
    returns (B, 1) f32
    """
    B, obs = x.shape
    hidden = w1.shape[1]

    # --- batch tile selection -------------------------------------------------
    # Per-row VMEM bytes: double-buffered x tile + h/value working set + output.
    per_row_bytes = 4 * (2 * obs + 3 * hidden + 2)
    tb_vmem = max(128, ((_VMEM_BUDGET // 2) // per_row_bytes) // 128 * 128)

    if B <= 256:
        # Small batch: single grid step; block shapes equal the full array dims,
        # so no (8, 128) divisibility constraint applies.
        TB = B
    else:
        # Large batch: TB multiple of 128, capped so the "parallel" batch axis
        # keeps >= 2 steps (v7x megacore) and VMEM stays within budget.
        TB = min(_round_up(tb, 128), tb_vmem, _round_up(pl.cdiv(B, 2), 128))
    grid = (pl.cdiv(B, TB),)

    flops = 2 * B * obs * hidden + 4 * B * hidden
    bytes_accessed = 4 * (B * obs + obs * hidden + 2 * hidden + 1 + B)

    out = pl.pallas_call(
        _value_model_kernel,
        out_shape=jax.ShapeDtypeStruct((1, B), jnp.float32),
        grid=grid,
        in_specs=[
            pl.BlockSpec((TB, obs), lambda i: (i, 0)),           # x: tiled over batch
            pl.BlockSpec((obs, hidden), lambda i: (0, 0)),       # w1: VMEM-resident
            pl.BlockSpec((1, hidden), lambda i: (0, 0)),         # b1: VMEM-resident
            pl.BlockSpec((1, hidden), lambda i: (0, 0)),         # w2 row: VMEM-resident
            pl.BlockSpec(memory_space=pltpu.MemorySpace.SMEM),   # b2: scalar in SMEM
        ],
        out_specs=pl.BlockSpec((1, TB), lambda i: (0, i)),       # lane-dense output
        compiler_params=pltpu.CompilerParams(
            dimension_semantics=("parallel",),                   # 2 TCs on v7x
            vmem_limit_bytes=_VMEM_BUDGET),
        cost_estimate=pl.CostEstimate(
            flops=flops, transcendentals=0, bytes_accessed=bytes_accessed),
    )(x, w1, b1, w2_row, b2)

    # (1, B) and (B, 1) share the same contiguous layout: free reshape, no copy.
    return out.reshape(B, 1)


def init_params(key, observation_space_size, hidden=_HIDDEN):
    """Deterministic synthetic parameters matching nn.Linear init ranges."""
    k1, k2, k3, k4 = jax.random.split(key, 4)
    bound1 = 1.0 / jnp.sqrt(observation_space_size)
    w1 = jax.random.uniform(k1, (observation_space_size, hidden),
                            minval=-bound1, maxval=bound1, dtype=jnp.float32)
    b1 = jax.random.uniform(k2, (1, hidden),
                            minval=-bound1, maxval=bound1, dtype=jnp.float32)
    bound2 = 1.0 / jnp.sqrt(hidden)
    w2_row = jax.random.uniform(k3, (1, hidden),
                                minval=-bound2, maxval=bound2, dtype=jnp.float32)
    b2 = jax.random.uniform(k4, (1, 1),
                            minval=-bound2, maxval=bound2, dtype=jnp.float32)
    return w1, b1, w2_row, b2


def _reference(x, w1, b1, w2_row, b2):
    return jnp.maximum(x @ w1 + b1, 0.0) @ w2_row.T + b2


def _bf16_grid(a):
    # Round to the bf16 grid so kernel vs. reference only differ by f32
    # accumulation order (keeps the comparison tolerance tight and robust).
    return a.astype(jnp.bfloat16).astype(jnp.float32)


def _check(name, batch, obs, tb, key):
    pkey, xkey = jax.random.split(key)
    w1, b1, w2_row, b2 = init_params(pkey, obs)
    x = jax.random.normal(xkey, (batch, obs), dtype=jnp.float32)
    x, w1, w2_row = _bf16_grid(x), _bf16_grid(w1), _bf16_grid(w2_row)

    out = value_model_forward(x, w1, b1, w2_row, b2, tb=tb)
    out = jax.block_until_ready(out)

    ref = _reference(x, w1, b1, w2_row, b2)
    assert out.shape == (batch, 1), (name, out.shape)
    assert jnp.allclose(out, ref, atol=2e-3, rtol=2e-3), name
    return out


if __name__ == "__main__":
    key = jax.random.PRNGKey(0)
    k1, k2, k3 = jax.random.split(key, 3)

    # Case 1: CartPole-like shapes (obs=4, batch=8) -> single grid step.
    _check("tiny", batch=8, obs=4, tb=4096, key=k1)

    # Case 2: batch grid with a ragged (masked) last block: B=300 -> TB=256,
    # grid=(2,) so both v7x TensorCores get a step.
    _check("grid", batch=300, obs=4, tb=4096, key=k2)

    # Case 3: larger observation vector (obs=64, batch=24), single step.
    _check("mxu", batch=24, obs=64, tb=4096, key=k3)

    print("KERNEL_OK")
</pallas_src>

<mosaic_0001>
module attributes {stable_mosaic.version = 11 : i64} {
  func.func @_value_model_kernel(%arg0: i32, %arg1: memref<8x4xf32, #tpu.memory_space<vmem>>, %arg2: memref<4x128xf32, #tpu.memory_space<vmem>>, %arg3: memref<1x128xf32, #tpu.memory_space<vmem>>, %arg4: memref<1x128xf32, #tpu.memory_space<vmem>>, %arg5: memref<1x1xf32, #tpu.memory_space<smem>>, %arg6: memref<1x8xf32, #tpu.memory_space<vmem>>) attributes {dimension_semantics = [#tpu.dimension_semantics<parallel>], iteration_bounds = array<i64: 1>, scalar_prefetch = 0 : i64, scratch_operands = 0 : i64, tpu.core_type = #tpu.core_type<tc>, window_params = [{transform_indices = @transform_0, window_bounds = array<i64: 8, 4>}, {pipeline_mode = #tpu.pipeline_mode<synchronous>, transform_indices = @transform_1, window_bounds = array<i64: 4, 128>}, {pipeline_mode = #tpu.pipeline_mode<synchronous>, transform_indices = @transform_2, window_bounds = array<i64: 1, 128>}, {pipeline_mode = #tpu.pipeline_mode<synchronous>, transform_indices = @transform_3, window_bounds = array<i64: 1, 128>}, {transform_indices = @transform_4, window_bounds = array<i64: 1, 1>}, {transform_indices = @transform_5, window_bounds = array<i64: 1, 8>}]} {
    %c0 = arith.constant 0 : index
    %c0_0 = arith.constant 0 : index
    %0 = vector.load %arg1[%c0, %c0_0] : memref<8x4xf32, #tpu.memory_space<vmem>>, vector<8x4xf32>
    %c0_1 = arith.constant 0 : index
    %c0_2 = arith.constant 0 : index
    %1 = vector.load %arg2[%c0_1, %c0_2] : memref<4x128xf32, #tpu.memory_space<vmem>>, vector<4x128xf32>
    %cst = arith.constant dense<0.000000e+00> : vector<8x128xf32>
    %2 = tpu.matmul %0, %1, %cst {dimension_numbers = #tpu.dot_dimension_numbers<[1], [0], [0], [1], [0, 0, 1, 1], [], []>} : vector<8x4xf32>, vector<4x128xf32>, vector<8x128xf32> -> vector<8x128xf32>
    %c0_3 = arith.constant 0 : index
    %c0_4 = arith.constant 0 : index
    %3 = vector.load %arg3[%c0_3, %c0_4] : memref<1x128xf32, #tpu.memory_space<vmem>>, vector<1x128xf32>
    %4 = vector.broadcast %3 : vector<1x128xf32> to vector<8x128xf32>
    %5 = arith.addf %2, %4 : vector<8x128xf32>
    %cst_5 = arith.constant 0.000000e+00 : f32
    %6 = vector.broadcast %cst_5 : f32 to vector<8x128xf32>
    %7 = arith.maximumf %5, %6 : vector<8x128xf32>
    %c0_6 = arith.constant 0 : index
    %c0_7 = arith.constant 0 : index
    %8 = vector.load %arg4[%c0_6, %c0_7] : memref<1x128xf32, #tpu.memory_space<vmem>>, vector<1x128xf32>
    "tpu.trace_start"() <{level = 10 : i32, message = "od,td->ot"}> : () -> ()
    %cst_8 = arith.constant dense<0.000000e+00> : vector<1x8xf32>
    %9 = tpu.matmul %8, %7, %cst_8 {dimension_numbers = #tpu.dot_dimension_numbers<[1], [1], [0], [0], [0, 0, 1, 0], [], []>} : vector<1x128xf32>, vector<8x128xf32>, vector<1x8xf32> -> vector<1x8xf32>
    "tpu.trace_stop"() : () -> ()
    %c0_9 = arith.constant 0 : index
    %c0_10 = arith.constant 0 : index
    %10 = memref.load %arg5[%c0_9, %c0_10] : memref<1x1xf32, #tpu.memory_space<smem>>
    %11 = vector.broadcast %10 : f32 to vector<1x8xf32>
    %12 = arith.addf %9, %11 : vector<1x8xf32>
    %c0_11 = arith.constant 0 : index
    %c0_12 = arith.constant 0 : index
    %13 = vector.load %arg6[%c0_11, %c0_12] : memref<1x8xf32, #tpu.memory_space<vmem>>, vector<1x8xf32>
    tpu.vector_store %arg6[%c0_11, %c0_12], %12 {strides = array<i32>} : memref<1x8xf32, #tpu.memory_space<vmem>>, vector<1x8xf32>,
    return
  }
  func.func @transform_0(%arg0: i32) -> (i32, i32) {
    %c0_i32 = arith.constant 0 : i32
    %c0_i32_0 = arith.constant 0 : i32
    return %arg0, %c0_i32 : i32, i32
  }
  func.func @transform_1(%arg0: i32) -> (i32, i32) {
    %c0_i32 = arith.constant 0 : i32
    %c0_i32_0 = arith.constant 0 : i32
    %c0_i32_1 = arith.constant 0 : i32
    return %c0_i32, %c0_i32_0 : i32, i32
  }
  func.func @transform_2(%arg0: i32) -> (i32, i32) {
    %c0_i32 = arith.constant 0 : i32
    %c0_i32_0 = arith.constant 0 : i32
    %c0_i32_1 = arith.constant 0 : i32
    return %c0_i32, %c0_i32_0 : i32, i32
  }
  func.func @transform_3(%arg0: i32) -> (i32, i32) {
    %c0_i32 = arith.constant 0 : i32
    %c0_i32_0 = arith.constant 0 : i32
    %c0_i32_1 = arith.constant 0 : i32
    return %c0_i32, %c0_i32_0 : i32, i32
  }
  func.func @transform_4(%arg0: i32) -> (i32, i32) {
    %c0_i32 = arith.constant 0 : i32
    %c0_i32_0 = arith.constant 0 : i32
    %c0_i32_1 = arith.constant 0 : i32
    return %c0_i32, %c0_i32_0 : i32, i32
  }
  func.func @transform_5(%arg0: i32) -> (i32, i32) {
    %c0_i32 = arith.constant 0 : i32
    %c0_i32_0 = arith.constant 0 : i32
    return %c0_i32, %arg0 : i32, i32
  }
}

</mosaic_0001>

<llo_original>
// kernel: tpu_custom_call.1
$region0: #{tpu_custom_call.1}
  #allocation0 [shape = 'u32[]', space=smem, size = 0x4, offset = 0x4, fixed_abs, tag = 'smem constant byte address 0x4 - core index']
  #allocation1 [shape = 'u32[144,128]{1,0:T(1,128)}', space=vmem, size = 0x12000, scoped, tag = 'internal scratch']
  #allocation2 [shape = 'f32[1,1]{1,0:T(1,128)S(6)}', space=smem, size = 0x200, scoped, tag = 'scoped memory for tpu_custom_call.1']
  %s0 = inlined_call_operand.vmem [shape: f32[8,4], index: 0, kind: input, shape index: {}]
  %s1 = inlined_call_operand.vmem [shape: f32[4,128], index: 1, kind: input, shape index: {}]
  %s2 = inlined_call_operand.vmem [shape: f32[1,128], index: 2, kind: input, shape index: {}]
  %s3 = inlined_call_operand.vmem [shape: f32[1,128], index: 3, kind: input, shape index: {}]
  %s4 = inlined_call_operand.<no memory space> [shape: f32[1,1], index: 4, kind: input, shape index: {}]
  %s5 = inlined_call_operand.hbm [shape: f32[1,8], index: 5, kind: output, shape index: {}]
  %s6 = sld [smem:[#allocation0]]
  $region30: #{tpu_custom_call.1} parent=0
    _
  %s8 = ssub.s32 1, %s6
  %s9 = scalar_select 0, %s8, %s6
  %10 = sst [smem:[#allocation2]] %s4
  $region1: #{tpu_custom_call.1} parent=0
    #allocation3 [shape = 'u8[512]{0}', space=vmem, size = 0x400, scoped, tag = 'output window, operand 0, single buffered']
    #allocation4 [shape = 's32[1]{0}', space=sflag, size = 0x4, scoped, tag = 'scoped memory for tpu_custom_call.1']
    %11 = vsyncpa [#allocation4], 0
    // Predicated region
    $region2: #{tpu_custom_call.1} parent=1 // pred_check
      _
    $region3: #{tpu_custom_call.1} parent=1 // pred_check_branch
      %13 = sbr.rel (0) target = $region5
    $region4: #{tpu_custom_call.1} parent=1 // pred_region
      _
    $region5: #{tpu_custom_call.1} parent=1 // pred_fallthru
      _
    // Predicated region
    $region6: #{tpu_custom_call.1} parent=1 // pred_check
      _
    $region7: #{tpu_custom_call.1} parent=1 // pred_check_branch
      %15 = sbr.rel (0) target = $region9
    $region8: #{tpu_custom_call.1} parent=1 // pred_region
      _
    $region9: #{tpu_custom_call.1} parent=1 // pred_fallthru
      _
    // Predicated region
    $region10: #{tpu_custom_call.1} parent=1 // pred_check
      _
    $region11: #{tpu_custom_call.1} parent=1 // pred_check_branch
      %17 = sbr.rel (0) target = $region13
    $region12: #{tpu_custom_call.1} parent=1 // pred_region
      _
    $region13: #{tpu_custom_call.1} parent=1 // pred_fallthru
      _
    // Predicated region
    $region14: #{tpu_custom_call.1} parent=1 // pred_check
      _
    $region15: #{tpu_custom_call.1} parent=1 // pred_check_branch
      %19 = sbr.rel (0) target = $region17
    $region16: #{tpu_custom_call.1} parent=1 // pred_region
      _
    $region17: #{tpu_custom_call.1} parent=1 // pred_fallthru
      _
    // Predicated region
    $region18: #{tpu_custom_call.1} parent=1 // pred_check
      _
    $region19: #{tpu_custom_call.1} parent=1 // pred_check_branch
      %21 = sbr.rel (0) target = $region21
    $region20: #{tpu_custom_call.1} parent=1 // pred_region
      _
    $region21: #{tpu_custom_call.1} parent=1 // pred_fallthru
      _
    %v22 = vld [vmem:[%s0] sm:$0xff]
    %v23 = vld [vmem:[%s1] sm:$0xf]
    %v24 = vld [vmem:[%s2] sm:$0x1]
    %v26 = vlaneseq
    %v27 = vshrl.u32 %v26, 7
    %v28 = vsub.s32 0, %v27
    %v29 = vrot.slane %v24, %v28
    %vm31 = vcmask 31744
    %v33 = vsel %vm31, %v22, 0
    %vm35 = vcmask 1043456
    %v37 = vsel %vm35, %v23, 0
    %39 = vmatprep.subr.mxu0 0.0
    %40 = vmatpush1.msra.mxu0 0.0
    %41 = vmatprep.subr.mxu0 0.0
    %42 = vmatpush1.msra.mxu0 0.0
    %43 = vmatprep.subr.mxu0 0.0
    %44 = vmatpush1.msra.mxu0 0.0
    %45 = vmatprep.subr.mxu0 0.0
    %46 = vmatpush1.msra.mxu0 0.0
    %47 = vmatprep.subr.mxu0 0.0
    %48 = vmatpush1.msra.mxu0 0.0
    %49 = vmatprep.subr.mxu0 0.0
    %50 = vmatpush1.msra.mxu0 0.0
    %51 = vmatprep.subr.mxu0 0.0
    %52 = vmatpush1.msra.mxu0 0.0
    %53 = vmatprep.subr.mxu0 0.0
    %54 = vmatpush1.msra.mxu0 0.0
    %55 = vmatprep.subr.mxu0 0.0
    %56 = vmatpush1.msra.mxu0 0.0
    %57 = vmatprep.subr.mxu0 0.0
    %58 = vmatpush1.msra.mxu0 0.0
    %59 = vmatprep.subr.mxu0 0.0
    %60 = vmatpush1.msra.mxu0 0.0
    %61 = vmatprep.subr.mxu0 0.0
    %62 = vmatpush1.msra.mxu0 0.0
    %63 = vmatprep.subr.mxu0 0.0
    %64 = vmatpush1.msra.mxu0 0.0
    %65 = vmatprep.subr.mxu0 0.0
    %66 = vmatpush1.msra.mxu0 0.0
    %67 = vmatprep.subr.mxu0 0.0
    %68 = vmatpush1.msra.mxu0 0.0
    %69 = vmatprep.subr.mxu0 0.0
    %70 = vmatpush1.msra.mxu0 %v37
    %71 = vmatprep.subr.mxu0 0.0
    %72 = vmatpush2.msra.mxu0 0.0
    %73 = vmatprep.subr.mxu0 0.0
    %74 = vmatpush2.msra.mxu0 0.0
    %75 = vmatprep.subr.mxu0 0.0
    %76 = vmatpush2.msra.mxu0 0.0
    %77 = vmatprep.subr.mxu0 0.0
    %78 = vmatpush2.msra.mxu0 0.0
    %79 = vmatprep.subr.mxu0 0.0
    %80 = vmatpush2.msra.mxu0 0.0
    %81 = vmatprep.subr.mxu0 0.0
    %82 = vmatpush2.msra.mxu0 0.0
    %83 = vmatprep.subr.mxu0 0.0
    %84 = vmatpush2.msra.mxu0 0.0
    %85 = vmatprep.subr.mxu0 0.0
    %86 = vmatpush2.msra.mxu0 0.0
    %87 = vmatprep.subr.mxu0 0.0
    %88 = vmatpush2.msra.mxu0 0.0
    %89 = vmatprep.subr.mxu0 0.0
    %90 = vmatpush2.msra.mxu0 0.0
    %91 = vmatprep.subr.mxu0 0.0
    %92 = vmatpush2.msra.mxu0 0.0
    %93 = vmatprep.subr.mxu0 0.0
    %94 = vmatpush2.msra.mxu0 0.0
    %95 = vmatprep.subr.mxu0 0.0
    %96 = vmatpush2.msra.mxu0 0.0
    %97 = vmatprep.subr.mxu0 0.0
    %98 = vmatpush2.msra.mxu0 0.0
    %99 = vmatprep.subr.mxu0 0.0
    %100 = vmatpush2.msra.mxu0 0.0
    %101 = vmatprep.subr.mxu0 0.0
    %102 = vmatpush2.msra.mxu0 0.0
    %103 = vmatprep.mubr.f32.mxu0 0.0
    %104 = vmatmul.mubr.f32.gmra.mxu0 %v33
    %v105 = vpop.f32.mrf.mxu0
    %v106 = vadd.f32 %v29, %v105
    %v107 = vpop.f32.mrf.mxu0
    %108 = vdwg.mxu0
    %v109 = vmax.f32 %v106, 0.0
    %v110 = vld [vmem:[%s3] sm:$0x1]
    %s111 = sld [smem:[#allocation2]]
    %v112 = vstv %s111
    %113 = vmatprep.subr.mxu0 0.0
    %114 = vmatpush1.xpose.msra.mxu0 0.0
    %115 = vmatprep.subr.mxu0 0.0
    %116 = vmatpush1.xpose.msra.mxu0 0.0
    %117 = vmatprep.subr.mxu0 0.0
    %118 = vmatpush1.xpose.msra.mxu0 0.0
    %119 = vmatprep.subr.mxu0 0.0
    %120 = vmatpush1.xpose.msra.mxu0 0.0
    %121 = vmatprep.subr.mxu0 0.0
    %122 = vmatpush1.xpose.msra.mxu0 0.0
    %123 = vmatprep.subr.mxu0 0.0
    %124 = vmatpush1.xpose.msra.mxu0 0.0
    %125 = vmatprep.subr.mxu0 0.0
    %126 = vmatpush1.xpose.msra.mxu0 0.0
    %127 = vmatprep.subr.mxu0 0.0
    %128 = vmatpush1.xpose.msra.mxu0 0.0
    %129 = vmatprep.subr.mxu0 0.0
    %130 = vmatpush1.xpose.msra.mxu0 0.0
    %131 = vmatprep.subr.mxu0 0.0
    %132 = vmatpush1.xpose.msra.mxu0 0.0
    %133 = vmatprep.subr.mxu0 0.0
    %134 = vmatpush1.xpose.msra.mxu0 0.0
    %135 = vmatprep.subr.mxu0 0.0
    %136 = vmatpush1.xpose.msra.mxu0 0.0
    %137 = vmatprep.subr.mxu0 0.0
    %138 = vmatpush1.xpose.msra.mxu0 0.0
    %139 = vmatprep.subr.mxu0 0.0
    %140 = vmatpush1.xpose.msra.mxu0 0.0
    %141 = vmatprep.subr.mxu0 0.0
    %142 = vmatpush1.xpose.msra.mxu0 0.0
    %143 = vmatprep.subr.mxu0 0.0
    %144 = vmatpush1.xpose.msra.mxu0 %v109
    %145 = vmatprep.subr.mxu0 0.0
    %146 = vmatpush2.xpose.msra.mxu0 0.0
    %147 = vmatprep.subr.mxu0 0.0
    %148 = vmatpush2.xpose.msra.mxu0 0.0
    %149 = vmatprep.subr.mxu0 0.0
    %150 = vmatpush2.xpose.msra.mxu0 0.0
    %151 = vmatprep.subr.mxu0 0.0
    %152 = vmatpush2.xpose.msra.mxu0 0.0
    %153 = vmatprep.subr.mxu0 0.0
    %154 = vmatpush2.xpose.msra.mxu0 0.0
    %155 = vmatprep.subr.mxu0 0.0
    %156 = vmatpush2.xpose.msra.mxu0 0.0
    %157 = vmatprep.subr.mxu0 0.0
    %158 = vmatpush2.xpose.msra.mxu0 0.0
    %159 = vmatprep.subr.mxu0 0.0
    %160 = vmatpush2.xpose.msra.mxu0 0.0
    %161 = vmatprep.subr.mxu0 0.0
    %162 = vmatpush2.xpose.msra.mxu0 0.0
    %163 = vmatprep.subr.mxu0 0.0
    %164 = vmatpush2.xpose.msra.mxu0 0.0
    %165 = vmatprep.subr.mxu0 0.0
    %166 = vmatpush2.xpose.msra.mxu0 0.0
    %167 = vmatprep.subr.mxu0 0.0
    %168 = vmatpush2.xpose.msra.mxu0 0.0
    %169 = vmatprep.subr.mxu0 0.0
    %170 = vmatpush2.xpose.msra.mxu0 0.0
    %171 = vmatprep.subr.mxu0 0.0
    %172 = vmatpush2.xpose.msra.mxu0 0.0
    %173 = vmatprep.subr.mxu0 0.0
    %174 = vmatpush2.xpose.msra.mxu0 0.0
    %175 = vmatprep.subr.mxu0 0.0
    %176 = vmatpush2.xpose.msra.mxu0 0.0
    %177 = vmatprep.mubr.f32.mxu0 0.0
    %178 = vmatmul.mubr.f32.gmra.mxu0 %v110
    %v179 = vpop.f32.mrf.mxu0
    %v180 = vadd.f32 %v112, %v179
    %v181 = vpop.f32.mrf.mxu0
    %182 = vdwg.mxu0
    %vm183 = vcmask 57344
    %184 = vst.msk [vmem:[#allocation3] sm:$0x1] %vm183, %v180
    // Predicated region
    $region22: #{tpu_custom_call.1} parent=1 // pred_check
      _
    $region23: #{tpu_custom_call.1} parent=1 // pred_check_branch
      %186 = sbr.rel (0) target = $region25
    $region24: #{tpu_custom_call.1} parent=1 // pred_region
      %s188 = ssub.s32 16, 16
      %189 = vsyncadd [#allocation4], %s188
      %s191 = sshll.u32 [#allocation3], 4
      %s192 = int_to_ptr.vmem [resolvable:$true] %s191
      %194 = dma.vmem_to_hbm [thread:$0]  %s192, 16, %s5, [#allocation4]
    $region25: #{tpu_custom_call.1} parent=1 // pred_fallthru
      _
    // Predicated region
    $region26: #{tpu_custom_call.1} parent=1 // pred_check
      _
    $region27: #{tpu_custom_call.1} parent=1 // pred_check_branch
      %196 = sbr.rel (0) target = $region29
    $region28: #{tpu_custom_call.1} parent=1 // pred_region
      %197 = dma.done [#allocation4], 16
    $region29: #{tpu_custom_call.1} parent=1 // pred_fallthru
      _
    %198 = vsyncpa [#allocation4], 1

</llo_original>
